<compile_context>
chip_gen: v7x
topology: tpu7x:2x2x1
jax: 0.10.0
libtpu: 0.0.40
codegen_flags: <defaults>
</compile_context>

<pallas_src>
import functools

import jax
import jax.numpy as jnp
from jax.experimental import pallas as pl
from jax.experimental.pallas import tpu as pltpu


def _rms_norm_kernel(x_ref, w_ref, o_ref, *, eps):
    xf = x_ref[...].astype(jnp.float32)                         # (tm, H) fp32, cast once
    ms = jnp.mean(xf * xf, axis=-1, keepdims=True)              # (tm, 1)  fp32 accum
    inv_rms = jax.lax.rsqrt(ms + eps)                           # EUP
    w = w_ref[...].astype(jnp.float32)                          # (1, H) broadcast
    o_ref[...] = (xf * inv_rms * w).astype(o_ref.dtype)


def _pick_row_tile(rows, hidden, in_bytes, out_bytes,
                   io_budget_bytes=24 * 1024 * 1024):
    """Largest multiple-of-8 row tile whose double-buffered I/O fits the budget."""
    bytes_per_row = 2 * hidden * (in_bytes + out_bytes)  # 2 pipeline buffers / operand
    budget_rows = max(8, io_budget_bytes // bytes_per_row)
    if budget_rows >= rows:
        # Whole problem in one block; a full-extent block dim is always legal
        # regardless of (8, 128) divisibility.
        return rows
    tm = (budget_rows // 8) * 8
    return max(8, min(tm, 2048))


def mixed_fused_rms_norm(hidden_states, weight, eps=1e-5, out_dtype=None,
                         block_rows=None):
    """RMSNorm over the last axis; output cast to `weight.dtype` (reference).

    `out_dtype=jnp.bfloat16` is an opt-in deviation that halves writeback
    traffic when downstream consumers accept bf16. `block_rows` overrides the
    auto-chosen row tile (testing / tuning).
    """
    in_dtype = hidden_states.dtype
    if out_dtype is None:
        # Reference: output_higher_precision.to(dtype=weight_dtype)
        out_dtype = weight.dtype

    orig_shape = hidden_states.shape
    H = int(orig_shape[-1])
    rows = 1
    for d in orig_shape[:-1]:
        rows *= int(d)
    rows = max(rows, 1)

    x2d = hidden_states.reshape(rows, H)
    w2d = weight.reshape(1, H)

    if block_rows is None:
        tm = _pick_row_tile(rows, H,
                            jnp.dtype(in_dtype).itemsize,
                            jnp.dtype(out_dtype).itemsize)
    else:
        tm = min(int(block_rows), rows)
        if tm < rows:
            tm = max(8, (tm // 8) * 8)  # non-full blocks must be multiples of 8

    grid = (pl.cdiv(rows, tm),)

    kernel = functools.partial(_rms_norm_kernel, eps=float(eps))
    out2d = pl.pallas_call(
        kernel,
        out_shape=jax.ShapeDtypeStruct((rows, H), out_dtype),
        grid_spec=pltpu.PrefetchScalarGridSpec(
            num_scalar_prefetch=0,
            grid=grid,
            in_specs=[
                pl.BlockSpec((tm, H), lambda i: (i, 0)),
                pl.BlockSpec((1, H), lambda i: (0, 0)),
            ],
            out_specs=pl.BlockSpec((tm, H), lambda i: (i, 0)),
        ),
        compiler_params=pltpu.CompilerParams(
            # Row grid is embarrassingly parallel -> dual-TC sharding on v7x.
            dimension_semantics=("parallel",),
            # Raise the scoped-VMEM default (16 MiB v5e / 32 MiB v6e,v7x) so the
            # large row tile materializes; still under v7x's 64 MiB physical VMEM.
            vmem_limit_bytes=48 * 1024 * 1024,
        ),
    )(x2d, w2d)

    return out2d.reshape(orig_shape)


class MixedFusedRMSNorm:
    """JAX mirror of the torch module (forward only)."""

    def __init__(self, normalized_shape, eps=1e-5, add_unit_offset=False):
        if isinstance(normalized_shape, int):
            normalized_shape = (normalized_shape,)
        self.normalized_shape = tuple(normalized_shape)
        self.eps = eps
        self.add_unit_offset = add_unit_offset
        # reset_parameters(): zeros_ when add_unit_offset else ones_
        init_fn = jnp.zeros if add_unit_offset else jnp.ones
        self.weight = init_fn(self.normalized_shape, dtype=jnp.float32)

    def __call__(self, hidden_states):
        assert len(self.normalized_shape) == 1, "kernel supports 1-D normalized_shape"
        # With add_unit_offset the parameter is zero-initialised and the
        # effective scale is (1 + weight); apply the offset here so the forward
        # is not identically zero (intended deeplink_ext semantics).
        w = self.weight + 1.0 if self.add_unit_offset else self.weight
        return mixed_fused_rms_norm(hidden_states, w, self.eps)

    # TODO(synk): backward pass (rms_norm_backward / autograd) not implemented —
    # forward only.


if __name__ == "__main__":
    key = jax.random.PRNGKey(0)
    batch, seq, hidden = 2, 8, 32
    x = jax.random.normal(key, (batch, seq, hidden), dtype=jnp.float32).astype(jnp.bfloat16)

    module = MixedFusedRMSNorm(hidden, eps=1e-5)
    out = jax.block_until_ready(module(x))

    # Pure-JAX reference (fp32 compute, cast to weight dtype).
    def ref_fn(xv, wv, eps):
        xf = xv.astype(jnp.float32)
        inv = jax.lax.rsqrt(jnp.mean(xf * xf, axis=-1, keepdims=True) + eps)
        return (xf * inv * wv.astype(jnp.float32)).astype(wv.dtype)

    ref = ref_fn(x, module.weight, 1e-5)
    assert out.shape == x.shape
    assert out.dtype == jnp.float32  # weight dtype
    assert jnp.allclose(out, ref, atol=1e-5, rtol=1e-5)

    # Exercise the cdiv grid / ragged last block path with a forced small tile:
    # rows = 21, tm = 8 -> grid = 3, last block clipped to 5 valid rows.
    x2 = jax.random.normal(jax.random.PRNGKey(0), (3, 7, hidden),
                           dtype=jnp.float32).astype(jnp.bfloat16)
    w2 = jnp.ones((hidden,), dtype=jnp.float32)
    out2 = jax.block_until_ready(
        mixed_fused_rms_norm(x2, w2, eps=1e-5, block_rows=8))
    ref2 = ref_fn(x2, w2, 1e-5)
    assert out2.shape == x2.shape and out2.dtype == jnp.float32
    assert jnp.allclose(out2, ref2, atol=1e-5, rtol=1e-5)

    print("KERNEL_OK")
</pallas_src>

<mosaic_0001>
module attributes {stable_mosaic.version = 11 : i64} {
  func.func @_rms_norm_kernel(%arg0: i32, %arg1: memref<16x32xbf16, #tpu.memory_space<vmem>>, %arg2: memref<1x32xf32, #tpu.memory_space<vmem>>, %arg3: memref<16x32xf32, #tpu.memory_space<vmem>>) attributes {dimension_semantics = [#tpu.dimension_semantics<parallel>], iteration_bounds = array<i64: 1>, scalar_prefetch = 0 : i64, scratch_operands = 0 : i64, tpu.core_type = #tpu.core_type<tc>, window_params = [{transform_indices = @transform_0, window_bounds = array<i64: 16, 32>}, {pipeline_mode = #tpu.pipeline_mode<synchronous>, transform_indices = @transform_1, window_bounds = array<i64: 1, 32>}, {transform_indices = @transform_2, window_bounds = array<i64: 16, 32>}]} {
    %c0 = arith.constant 0 : index
    %c0_0 = arith.constant 0 : index
    %0 = vector.load %arg1[%c0, %c0_0] : memref<16x32xbf16, #tpu.memory_space<vmem>>, vector<16x32xbf16>
    %1 = arith.extf %0 : vector<16x32xbf16> to vector<16x32xf32>
    %2 = arith.mulf %1, %1 : vector<16x32xf32>
    %cst = arith.constant dense<0.000000e+00> : vector<16xf32>
    %3 = vector.multi_reduction <add>, %2, %cst [1] : vector<16x32xf32> to vector<16xf32>
    %4 = vector.shape_cast %3 : vector<16xf32> to vector<16x1xf32>
    %cst_1 = arith.constant 3.200000e+01 : f32
    %5 = vector.broadcast %cst_1 : f32 to vector<16x1xf32>
    %6 = arith.divf %4, %5 : vector<16x1xf32>
    %cst_2 = arith.constant 9.99999974E-6 : f32
    %7 = vector.broadcast %cst_2 : f32 to vector<16x1xf32>
    %8 = arith.addf %6, %7 : vector<16x1xf32>
    %9 = math.rsqrt %8 : vector<16x1xf32>
    %c0_3 = arith.constant 0 : index
    %c0_4 = arith.constant 0 : index
    %10 = vector.load %arg2[%c0_3, %c0_4] : memref<1x32xf32, #tpu.memory_space<vmem>>, vector<1x32xf32>
    %11 = vector.broadcast %9 : vector<16x1xf32> to vector<16x32xf32>
    %12 = arith.mulf %1, %11 : vector<16x32xf32>
    %13 = vector.broadcast %10 : vector<1x32xf32> to vector<16x32xf32>
    %14 = arith.mulf %12, %13 : vector<16x32xf32>
    %c0_5 = arith.constant 0 : index
    %c0_6 = arith.constant 0 : index
    %15 = vector.load %arg3[%c0_5, %c0_6] : memref<16x32xf32, #tpu.memory_space<vmem>>, vector<16x32xf32>
    tpu.vector_store %arg3[%c0_5, %c0_6], %14 {strides = array<i32>} : memref<16x32xf32, #tpu.memory_space<vmem>>, vector<16x32xf32>,
    return
  }
  func.func @transform_0(%arg0: i32) -> (i32, i32) {
    %c0_i32 = arith.constant 0 : i32
    %c0_i32_0 = arith.constant 0 : i32
    return %arg0, %c0_i32 : i32, i32
  }
  func.func @transform_1(%arg0: i32) -> (i32, i32) {
    %c0_i32 = arith.constant 0 : i32
    %c0_i32_0 = arith.constant 0 : i32
    %c0_i32_1 = arith.constant 0 : i32
    return %c0_i32, %c0_i32_0 : i32, i32
  }
  func.func @transform_2(%arg0: i32) -> (i32, i32) {
    %c0_i32 = arith.constant 0 : i32
    %c0_i32_0 = arith.constant 0 : i32
    return %arg0, %c0_i32 : i32, i32
  }
}

</mosaic_0001>

<llo_original>
// kernel: tpu_custom_call.1
$region0: #{tpu_custom_call.1}
  #allocation0 [shape = 'u32[]', space=smem, size = 0x4, offset = 0x4, fixed_abs, tag = 'smem constant byte address 0x4 - core index']
  #allocation1 [shape = 'u32[144,128]{1,0:T(1,128)}', space=vmem, size = 0x12000, scoped, tag = 'internal scratch']
  %s0 = inlined_call_operand.hbm [shape: bf16[16,32], index: 0, kind: input, shape index: {}]
  %s1 = inlined_call_operand.vmem [shape: f32[1,32], index: 1, kind: input, shape index: {}]
  %s2 = inlined_call_operand.hbm [shape: f32[16,32], index: 2, kind: output, shape index: {}]
  %s3 = sld [smem:[#allocation0]]
  $region22: #{tpu_custom_call.1} parent=0
    _
  %s5 = ssub.s32 1, %s3
  %s6 = scalar_select 0, %s5, %s3
  $region1: #{tpu_custom_call.1} parent=0
    #allocation2 [shape = 'u8[4096]{0}', space=vmem, size = 0x1000, scoped, tag = 'input window, operand 0, single buffered']
    #allocation3 [shape = 's32[1]{0}', space=sflag, size = 0x4, scoped, tag = 'scoped memory for tpu_custom_call.1']
    #allocation4 [shape = 's32[1]{0}', space=sflag, size = 0x4, scoped, tag = 'scoped memory for tpu_custom_call.1']
    #allocation5 [shape = 'u8[8192]{0}', space=vmem, size = 0x2000, scoped, tag = 'output window, operand 0, single buffered']
    %7 = vsyncpa [#allocation3], 0
    %8 = vsyncpa [#allocation4], 0
    // Predicated region
    $region2: #{tpu_custom_call.1} parent=1 // pred_check
      _
    $region3: #{tpu_custom_call.1} parent=1 // pred_check_branch
      %10 = sbr.rel (0) target = $region5
    $region4: #{tpu_custom_call.1} parent=1 // pred_region
      %s12 = ssub.s32 128, 128
      %13 = vsyncadd [#allocation3], %s12
      %s14 = sshll.u32 [#allocation2], 4
      %s15 = int_to_ptr.vmem [resolvable:$true] %s14
      %20 = dma.hbm_to_vmem [thread:$0]  %s0, 128, %s15, [#allocation3], 64, 64, 4
    $region5: #{tpu_custom_call.1} parent=1 // pred_fallthru
      _
    // Predicated region
    $region6: #{tpu_custom_call.1} parent=1 // pred_check
      _
    $region7: #{tpu_custom_call.1} parent=1 // pred_check_branch
      %22 = sbr.rel (0) target = $region9
    $region8: #{tpu_custom_call.1} parent=1 // pred_region
      _
    $region9: #{tpu_custom_call.1} parent=1 // pred_fallthru
      _
    // Predicated region
    $region10: #{tpu_custom_call.1} parent=1 // pred_check
      _
    $region11: #{tpu_custom_call.1} parent=1 // pred_check_branch
      %24 = sbr.rel (0) target = $region13
    $region12: #{tpu_custom_call.1} parent=1 // pred_region
      %25 = dma.done [#allocation3], 128
    $region13: #{tpu_custom_call.1} parent=1 // pred_fallthru
      _
    %v26 = vld [vmem:[#allocation2] sm:$0xf]
    %v27 = vld [vmem:[#allocation2 + $0x4] sm:$0xf]
    %v28 = vunpack.c.l.bf16 %v26
    %v29 = vunpack.c.l.bf16 %v27
    %v30 = vmul.f32 %v28, %v28
    %v31 = vmul.f32 %v29, %v29
    %vm32 = vcmask 261120
    %v33 = vsel %vm32, %v30, 0.0
    %34 = vadd.xlane.f32.xlu0 %v33
    %v35 = vpop.xlane.xlu0 %34
    %v36 = vsel %vm32, %v31, 0.0
    %37 = vadd.xlane.f32.xlu0 %v36
    %v38 = vpop.xlane.xlu0 %37
    %v39 = vrcp.pop 32.0
    %v40 = vmul.f32 %v35, %v39
    %v41 = vmul.f32 %v38, %v39
    %v42 = vadd.f32 %v40, 1e-05
    %v43 = vadd.f32 %v41, 1e-05
    %v44 = vrsqrt.pop %v42
    %v45 = vrsqrt.pop %v43
    %v46 = vld [vmem:[%s1] sm:$0x1]
    %v47 = vmul.f32 %v28, %v44
    %v48 = vmul.f32 %v29, %v45
    %v50 = vlaneseq
    %v51 = vshrl.u32 %v50, 7
    %v52 = vsub.s32 0, %v51
    %v53 = vrot.slane %v46, %v52
    %v55 = vmul.f32 %v47, %v53
    %v56 = vmul.f32 %v48, %v53
    %57 = vst.msk [vmem:[#allocation5] sm:$0xff] %vm32, %v55
    %58 = vst.msk [vmem:[#allocation5 + $0x8] sm:$0xff] %vm32, %v56
    // Predicated region
    $region14: #{tpu_custom_call.1} parent=1 // pred_check
      _
    $region15: #{tpu_custom_call.1} parent=1 // pred_check_branch
      %60 = sbr.rel (0) target = $region17
    $region16: #{tpu_custom_call.1} parent=1 // pred_region
      %s62 = ssub.s32 256, 256
      %63 = vsyncadd [#allocation4], %s62
      %s64 = sshll.u32 [#allocation5], 4
      %s65 = int_to_ptr.vmem [resolvable:$true] %s64
      %70 = dma.vmem_to_hbm [thread:$0]  %s65, 256, %s2, [#allocation4], 128, 128, 8
    $region17: #{tpu_custom_call.1} parent=1 // pred_fallthru
      _
    // Predicated region
    $region18: #{tpu_custom_call.1} parent=1 // pred_check
      _
    $region19: #{tpu_custom_call.1} parent=1 // pred_check_branch
      %72 = sbr.rel (0) target = $region21
    $region20: #{tpu_custom_call.1} parent=1 // pred_region
      %73 = dma.done [#allocation4], 256
    $region21: #{tpu_custom_call.1} parent=1 // pred_fallthru
      _
    %74 = vsyncpa [#allocation3], 1
    %75 = vsyncpa [#allocation4], 1

</llo_original>
